<compile_context>
chip_gen: v7x
topology: tpu7x:2x2x1
jax: 0.10.0
libtpu: 0.0.40
codegen_flags: <defaults>
</compile_context>

<pallas_src>
import functools

import jax
import jax.numpy as jnp
from jax.experimental import pallas as pl
from jax.experimental.pallas import tpu as pltpu

SIGMA_MIN = -5.0
SIGMA_MAX = -0.3


def _cdiv(a, b):
    return (a + b - 1) // b


def _round_up(x, m):
    return _cdiv(x, m) * m


def _sigma_transform(y):
    s = jnp.tanh(y)
    s = SIGMA_MIN + 0.5 * (SIGMA_MAX - SIGMA_MIN) * (s + 1.0)
    return jnp.exp(s)


def _cond_gauss_split_kernel(ctx_ref, w_ref, b_ref, out_ref):
    """D % 128 == 0: static lane-aligned split, sigma transform on half only."""
    ctx = ctx_ref[...]
    y = jnp.dot(ctx, w_ref[...], preferred_element_type=jnp.float32)
    y = y + b_ref[...]
    d = y.shape[-1] // 2
    out_ref[:, :d] = y[:, :d].astype(out_ref.dtype)                     # mean head
    out_ref[:, d:] = _sigma_transform(y[:, d:]).astype(out_ref.dtype)   # sigma head


def _cond_gauss_masked_kernel(ctx_ref, w_ref, b_ref, out_ref, *, d_split):
    """D not lane-aligned: full-slab transform + iota mask (tanh bounds exp)."""
    ctx = ctx_ref[...]
    y = jnp.dot(ctx, w_ref[...], preferred_element_type=jnp.float32)
    y = y + b_ref[...]
    s = _sigma_transform(y)
    col = jax.lax.broadcasted_iota(jnp.int32, y.shape, 1)
    out_ref[...] = jnp.where(col >= d_split, s, y).astype(out_ref.dtype)


def _choose_batch_tile(B, ctx_cols, slab_cols, out_el_bytes):
    """Byte-budgeted batch tile; minimal padding; >=2 grid steps when possible."""
    B8 = _round_up(max(B, 1), 8)
    # Per-row bytes of the double-buffered pipelined tiles (ctx in + out).
    row_bytes = 2 * (ctx_cols * 4 + slab_cols * out_el_bytes)
    # Resident weight + bias (pipeliner double-buffers them even though their
    # index_map is constant; account for 2x instead of relying on Buffered(1)).
    resident = 2 * (ctx_cols * slab_cols * 4 + slab_cols * 4)
    avail = max((40 << 20) - resident, 1 << 20)       # conservative v7x budget
    cap_bytes = min(4 << 20, avail)                   # ~4 MiB/step amortizes 0.35us overhead
    bb_cap = max(8, (cap_bytes // row_bytes) // 8 * 8)
    g = _cdiv(B8, bb_cap)
    if B8 >= 16:           # give both v7x TensorCores work when batch allows
        g = max(g, 2)
    bb = _round_up(_cdiv(B8, g), 8)   # padding waste < 8 rows per tile
    return bb, g, resident


def conditional_diag_linear_gaussian_forward(z, context, w_loc, b_loc, w_ls, b_ls):
    """Returns (mean, std), matching ConditionalDiagLinearGaussian.forward."""
    B, C = context.shape
    D = w_loc.shape[1]
    assert z.shape == (B, D), "z must have shape (batch, prod(shape))"
    out_dtype = z.dtype
    out_el_bytes = jnp.dtype(out_dtype).itemsize

    # Fused lane-dense slab [W_loc | W_ls | 0-pad]; pad width to a multiple of
    # 128 so every output store is an unmasked lane-dense vst.
    lane_pad = _round_up(2 * D, 128) - 2 * D
    w = jnp.concatenate([w_loc, w_ls], axis=1).astype(jnp.float32)       # (C, 2D)
    b = jnp.concatenate([b_loc, b_ls], axis=0).astype(jnp.float32)       # (2D,)
    if lane_pad:
        w = jnp.pad(w, ((0, 0), (0, lane_pad)))
        b = jnp.pad(b, ((0, lane_pad),))
    W_cols = 2 * D + lane_pad
    b = b.reshape(1, W_cols)

    bb, g, resident = _choose_batch_tile(B, C, W_cols, out_el_bytes)
    B_pad = bb * g
    context_p = context.astype(jnp.float32)
    if B_pad != B:
        context_p = jnp.pad(context_p, ((0, B_pad - B), (0, 0)))

    # VMEM request = actual need + margin, capped below v7x's 64 MiB physical.
    tiles = 2 * bb * (C * 4 + W_cols * out_el_bytes)
    vmem_limit = int(max(16 << 20, min(resident + tiles + (4 << 20), 48 << 20)))
    # TODO(synk): if the resident weight slab (C*2D) ever approaches ~half of
    # v7x's 64 MiB VMEM, add N (output-column) / K (context) grid axes with an
    # f32 accumulator instead of letting bb shrink.

    if D % 128 == 0:
        kernel = _cond_gauss_split_kernel
    else:
        kernel = functools.partial(_cond_gauss_masked_kernel, d_split=D)

    out = pl.pallas_call(
        kernel,
        out_shape=jax.ShapeDtypeStruct((B_pad, W_cols), out_dtype),
        grid_spec=pltpu.PrefetchScalarGridSpec(
            num_scalar_prefetch=0,
            grid=(g,),
            in_specs=[
                pl.BlockSpec((bb, C), lambda i: (i, 0)),        # context tile
                pl.BlockSpec((C, W_cols), lambda i: (0, 0)),    # fused weights (resident)
                pl.BlockSpec((1, W_cols), lambda i: (0, 0)),    # fused bias (resident)
            ],
            out_specs=pl.BlockSpec((bb, W_cols), lambda i: (i, 0)),  # [mean | std | pad]
        ),
        compiler_params=pltpu.CompilerParams(
            dimension_semantics=("parallel",),
            vmem_limit_bytes=vmem_limit,
        ),
    )(context_p, w, b)

    mean = out[:B, :D]
    std = out[:B, D:2 * D]
    return mean, std


def _reference(context, w_loc, b_loc, w_ls, b_ls):
    mean = context @ w_loc + b_loc
    s = jnp.tanh(context @ w_ls + b_ls)
    s = SIGMA_MIN + 0.5 * (SIGMA_MAX - SIGMA_MIN) * (s + 1.0)
    return mean, jnp.exp(s)


if __name__ == "__main__":
    key = jax.random.PRNGKey(0)

    # Two small configs: D=64 exercises the masked path (+ batch padding and a
    # 2-step "parallel" grid); D=128 exercises the lane-aligned split path.
    for (B, C, D) in [(20, 32, 64), (8, 32, 128)]:
        key, k1, k2, k3, k4, k5, k6 = jax.random.split(key, 7)
        z = jax.random.normal(k1, (B, D), dtype=jnp.float32)
        context = jax.random.normal(k2, (B, C), dtype=jnp.float32)
        w_loc = 0.1 * jax.random.normal(k3, (C, D), dtype=jnp.float32)
        b_loc = 0.1 * jax.random.normal(k4, (D,), dtype=jnp.float32)
        w_ls = 0.1 * jax.random.normal(k5, (C, D), dtype=jnp.float32)
        b_ls = 0.1 * jax.random.normal(k6, (D,), dtype=jnp.float32)

        mean, std = conditional_diag_linear_gaussian_forward(
            z, context, w_loc, b_loc, w_ls, b_ls)
        jax.block_until_ready((mean, std))

        mean_ref, std_ref = _reference(context, w_loc, b_loc, w_ls, b_ls)
        assert mean.shape == (B, D) and std.shape == (B, D)
        assert jnp.allclose(mean, mean_ref, atol=1e-5, rtol=1e-5), (B, C, D)
        assert jnp.allclose(std, std_ref, atol=1e-5, rtol=1e-5), (B, C, D)

    # TODO(synk): log_prob / get_qv / sample are not part of forward(); only
    # get_mean_std (== forward) is implemented as a kernel.
    print("KERNEL_OK")
</pallas_src>

<mosaic_0001>
module attributes {stable_mosaic.version = 11 : i64} {
  func.func @_cond_gauss_masked_kernel(%arg0: i32, %arg1: memref<16x32xf32, #tpu.memory_space<vmem>>, %arg2: memref<32x128xf32, #tpu.memory_space<vmem>>, %arg3: memref<1x128xf32, #tpu.memory_space<vmem>>, %arg4: memref<16x128xf32, #tpu.memory_space<vmem>>) attributes {dimension_semantics = [#tpu.dimension_semantics<parallel>], iteration_bounds = array<i64: 2>, scalar_prefetch = 0 : i64, scratch_operands = 0 : i64, tpu.core_type = #tpu.core_type<tc>, window_params = [{transform_indices = @transform_0, window_bounds = array<i64: 16, 32>}, {pipeline_mode = #tpu.pipeline_mode<synchronous>, transform_indices = @transform_1, window_bounds = array<i64: 32, 128>}, {pipeline_mode = #tpu.pipeline_mode<synchronous>, transform_indices = @transform_2, window_bounds = array<i64: 1, 128>}, {transform_indices = @transform_3, window_bounds = array<i64: 16, 128>}]} {
    %c0 = arith.constant 0 : index
    %c0_0 = arith.constant 0 : index
    %0 = vector.load %arg1[%c0, %c0_0] : memref<16x32xf32, #tpu.memory_space<vmem>>, vector<16x32xf32>
    %c0_1 = arith.constant 0 : index
    %c0_2 = arith.constant 0 : index
    %1 = vector.load %arg2[%c0_1, %c0_2] : memref<32x128xf32, #tpu.memory_space<vmem>>, vector<32x128xf32>
    %cst = arith.constant dense<0.000000e+00> : vector<16x128xf32>
    %2 = tpu.matmul %0, %1, %cst {dimension_numbers = #tpu.dot_dimension_numbers<[1], [0], [0], [1], [0, 0, 1, 1], [], []>} : vector<16x32xf32>, vector<32x128xf32>, vector<16x128xf32> -> vector<16x128xf32>
    %c0_3 = arith.constant 0 : index
    %c0_4 = arith.constant 0 : index
    %3 = vector.load %arg3[%c0_3, %c0_4] : memref<1x128xf32, #tpu.memory_space<vmem>>, vector<1x128xf32>
    %4 = vector.broadcast %3 : vector<1x128xf32> to vector<16x128xf32>
    %5 = arith.addf %2, %4 : vector<16x128xf32>
    %6 = math.tanh %5 : vector<16x128xf32>
    %cst_5 = arith.constant 1.000000e+00 : f32
    %7 = vector.broadcast %cst_5 : f32 to vector<16x128xf32>
    %8 = arith.addf %6, %7 : vector<16x128xf32>
    %cst_6 = arith.constant 2.350000e+00 : f32
    %9 = vector.broadcast %cst_6 : f32 to vector<16x128xf32>
    %10 = arith.mulf %9, %8 : vector<16x128xf32>
    %cst_7 = arith.constant -5.000000e+00 : f32
    %11 = vector.broadcast %cst_7 : f32 to vector<16x128xf32>
    %12 = arith.addf %11, %10 : vector<16x128xf32>
    %13 = math.exp %12 : vector<16x128xf32>
    %14 = tpu.iota {dimensions = array<i32: 1>} : vector<16x128xi32>
    %c64_i32 = arith.constant 64 : i32
    %15 = vector.broadcast %c64_i32 : i32 to vector<16x128xi32>
    %16 = arith.cmpi sge, %14, %15 : vector<16x128xi32>
    %17 = arith.select %16, %13, %5 : vector<16x128xi1>, vector<16x128xf32>
    %c0_8 = arith.constant 0 : index
    %c0_9 = arith.constant 0 : index
    %18 = vector.load %arg4[%c0_8, %c0_9] : memref<16x128xf32, #tpu.memory_space<vmem>>, vector<16x128xf32>
    tpu.vector_store %arg4[%c0_8, %c0_9], %17 {strides = array<i32>} : memref<16x128xf32, #tpu.memory_space<vmem>>, vector<16x128xf32>,
    return
  }
  func.func @transform_0(%arg0: i32) -> (i32, i32) {
    %c0_i32 = arith.constant 0 : i32
    %c0_i32_0 = arith.constant 0 : i32
    return %arg0, %c0_i32 : i32, i32
  }
  func.func @transform_1(%arg0: i32) -> (i32, i32) {
    %c0_i32 = arith.constant 0 : i32
    %c0_i32_0 = arith.constant 0 : i32
    %c0_i32_1 = arith.constant 0 : i32
    return %c0_i32, %c0_i32_0 : i32, i32
  }
  func.func @transform_2(%arg0: i32) -> (i32, i32) {
    %c0_i32 = arith.constant 0 : i32
    %c0_i32_0 = arith.constant 0 : i32
    %c0_i32_1 = arith.constant 0 : i32
    return %c0_i32, %c0_i32_0 : i32, i32
  }
  func.func @transform_3(%arg0: i32) -> (i32, i32) {
    %c0_i32 = arith.constant 0 : i32
    %c0_i32_0 = arith.constant 0 : i32
    return %arg0, %c0_i32 : i32, i32
  }
}

</mosaic_0001>

<llo_original>
// kernel: tpu_custom_call.1
$region0: #{tpu_custom_call.1}
  #allocation0 [shape = 'u32[]', space=smem, size = 0x4, offset = 0x4, fixed_abs, tag = 'smem constant byte address 0x4 - core index']
  #allocation1 [shape = 'u32[144,128]{1,0:T(1,128)}', space=vmem, size = 0x12000, scoped, tag = 'internal scratch']
  %s0 = inlined_call_operand.hbm [shape: f32[32,32], index: 0, kind: input, shape index: {}]
  %s1 = inlined_call_operand.hbm [shape: f32[32,128], index: 1, kind: input, shape index: {}]
  %s2 = inlined_call_operand.vmem [shape: f32[1,128], index: 2, kind: input, shape index: {}]
  %s3 = inlined_call_operand.hbm [shape: f32[32,128], index: 3, kind: output, shape index: {}]
  %s4 = sld [smem:[#allocation0]]
  $region53: #{tpu_custom_call.1} parent=0
    _
  %s6 = ssub.s32 1, %s4
  %s7 = scalar_select 0, %s6, %s4
  $region1: #{tpu_custom_call.1} parent=0
    #allocation2 [shape = 'u8[16384]{0}', space=vmem, size = 0x4000, scoped, tag = 'input window, operand 0']
    #allocation3 [shape = 's32[2]{0}', space=sflag, size = 0x8, scoped, tag = 'scoped memory for tpu_custom_call.1']
    #allocation4 [shape = 's32[2]{0}', space=sflag, size = 0x8, scoped, tag = 'scoped memory for tpu_custom_call.1']
    #allocation5 [shape = 'u8[16384]{0}', space=vmem, size = 0x4000, scoped, tag = 'input window, operand 1, single buffered']
    #allocation6 [shape = 's32[1]{0}', space=sflag, size = 0x4, scoped, tag = 'scoped memory for tpu_custom_call.1']
    #allocation7 [shape = 'u8[16384]{0}', space=vmem, size = 0x4000, scoped, tag = 'output window, operand 0']
    %8 = vsyncpa [#allocation3], 0
    %s9 = scalar_lea.sflag [#allocation3], 1
    %10 = vsyncpa %s9, 0
    %11 = vsyncpa [#allocation6], 0
    %12 = vsyncpa [#allocation4], 0
    %s13 = scalar_lea.sflag [#allocation4], 1
    %14 = vsyncpa %s13, 0
    loop: start=0, step=1, limit=4
    $region2: #{tpu_custom_call.1} parent=1 // loop_pre_header
      _
    $region3: #{tpu_custom_call.1} parent=1 // loop_header
      %s16 = sphi 0, %s20
      %p17 = scmp.ge.s32.totalorder %s16, 4
      %s26 = sphi 0, %s28
      %s29 = sphi 0, %s26
      %s30 = sphi 0, %s29
      %s46 = sphi 0, %s30
      %s50 = sphi 0, %s50
      %s52 = sphi 0, %s50
      %s53 = sphi 0, %s52
      %s67 = sphi 0, %s53
      %s71 = sphi 0, %s71
      %s73 = sphi 0, %s71
      %s74 = sphi 0, %s73
      %s88 = sphi 0, %s74
      %s94 = sphi 0, %s96
      %s97 = sphi 0, %s94
      %s98 = sphi 0, %s97
      %s114 = sphi 0, %s98
    $region4: #{tpu_custom_call.1} parent=1 // loop_header_branch
      %19 = sbr.rel (%p17) target = $region8
    $region5: #{tpu_custom_call.1} parent=1 // loop_body
      %s21 = ssub.s32 %s16, 1
      %s22 = ssub.s32 %s16, 2
      %s23 = sadd.s32 %s16, 1
      %s24 = ssub.s32 %s16, %s23
      %p25 = scmp.eq.s32.totalorder %s24, 0
      %s27 = sadd.s32 %s26, 1
      %s28 = scalar_select %p25, %s26, %s27
      %p31 = pneg %p25
      %p32 = scmp.eq.s32.totalorder %s16, 1
      %p33 = por %p31, %p32
      %p34 = scmp.ne.s32.totalorder %s26, %s29
      %p35 = scmp.eq.s32.totalorder %s16, 0
      %p36 = por %p34, %p35
      %p37 = scmp.ne.s32.totalorder %s26, %s29
      %p38 = scmp.eq.s32.totalorder %s21, 1
      %p39 = por %p37, %p38
      %p40 = scmp.ne.s32.totalorder %s29, %s30
      %p41 = scmp.eq.s32.totalorder %s21, 0
      %p42 = por %p40, %p41
      %p43 = scmp.ne.s32.totalorder %s29, %s30
      %p44 = scmp.eq.s32.totalorder %s22, 1
      %p45 = por %p43, %p44
      %p47 = scmp.ne.s32.totalorder %s30, %s46
      %p48 = scmp.eq.s32.totalorder %s22, 0
      %p49 = por %p47, %p48
      %s51 = sadd.s32 %s50, 1
      %p54 = scmp.eq.s32.totalorder %s16, 1
      %p55 = scmp.ne.s32.totalorder %s50, %s52
      %p56 = scmp.eq.s32.totalorder %s16, 0
      %p57 = por %p55, %p56
      %p58 = scmp.ne.s32.totalorder %s50, %s52
      %p59 = scmp.eq.s32.totalorder %s21, 1
      %p60 = por %p58, %p59
      %p61 = scmp.ne.s32.totalorder %s52, %s53
      %p62 = scmp.eq.s32.totalorder %s21, 0
      %p63 = por %p61, %p62
      %p64 = scmp.ne.s32.totalorder %s52, %s53
      %p65 = scmp.eq.s32.totalorder %s22, 1
      %p66 = por %p64, %p65
      %p68 = scmp.ne.s32.totalorder %s53, %s67
      %p69 = scmp.eq.s32.totalorder %s22, 0
      %p70 = por %p68, %p69
      %s72 = sadd.s32 %s71, 1
      %p75 = scmp.eq.s32.totalorder %s16, 1
      %p76 = scmp.ne.s32.totalorder %s71, %s73
      %p77 = scmp.eq.s32.totalorder %s16, 0
      %p78 = por %p76, %p77
      %p79 = scmp.ne.s32.totalorder %s71, %s73
      %p80 = scmp.eq.s32.totalorder %s21, 1
      %p81 = por %p79, %p80
      %p82 = scmp.ne.s32.totalorder %s73, %s74
      %p83 = scmp.eq.s32.totalorder %s21, 0
      %p84 = por %p82, %p83
      %p85 = scmp.ne.s32.totalorder %s73, %s74
      %p86 = scmp.eq.s32.totalorder %s22, 1
      %p87 = por %p85, %p86
      %p89 = scmp.ne.s32.totalorder %s74, %s88
      %p90 = scmp.eq.s32.totalorder %s22, 0
      %p91 = por %p89, %p90
      %s92 = ssub.s32 %s16, %s23
      %p93 = scmp.eq.s32.totalorder %s92, 0
      %s95 = sadd.s32 %s94, 1
      %s96 = scalar_select %p93, %s94, %s95
      %p99 = pneg %p93
      %p100 = scmp.eq.s32.totalorder %s16, 1
      %p101 = por %p99, %p100
      %p102 = scmp.ne.s32.totalorder %s94, %s97
      %p103 = scmp.eq.s32.totalorder %s16, 0
      %p104 = por %p102, %p103
      %p105 = scmp.ne.s32.totalorder %s94, %s97
      %p106 = scmp.eq.s32.totalorder %s21, 1
      %p107 = por %p105, %p106
      %p108 = scmp.ne.s32.totalorder %s97, %s98
      %p109 = scmp.eq.s32.totalorder %s21, 0
      %p110 = por %p108, %p109
      %p111 = scmp.ne.s32.totalorder %s97, %s98
      %p112 = scmp.eq.s32.totalorder %s22, 1
      %p113 = por %p111, %p112
      %p115 = scmp.ne.s32.totalorder %s98, %s114
      %p116 = scmp.eq.s32.totalorder %s22, 0
      %p117 = por %p115, %p116
      %p118 = scmp.le.s32.totalorder 1, %s16
      %p119 = scmp.lt.s32.totalorder %s16, 3
      %p120 = pnand %p118, %p119
      %p121 = pneg %p120
      // Predicated region
      $region9: #{tpu_custom_call.1} parent=5 // pred_check
        _
      $region10: #{tpu_custom_call.1} parent=5 // pred_check_branch
        %123 = sbr.rel (%p120) target = $region12
      $region11: #{tpu_custom_call.1} parent=5 // pred_region
        %s124 = ssub.s32 %s16, 1
        // Predicated region
        $region13: #{tpu_custom_call.1} parent=11 // pred_check
          %p125 = pneg %p63
        $region14: #{tpu_custom_call.1} parent=11 // pred_check_branch
          %127 = sbr.rel (%p125) target = $region16
        $region15: #{tpu_custom_call.1} parent=11 // pred_region
          %s129 = ssub.s32 512, 512
          %130 = vsyncadd [#allocation6], %s129
          %s131 = sshll.u32 [#allocation5], 4
          %s132 = int_to_ptr.vmem [resolvable:$true] %s131
          %137 = dma.hbm_to_vmem [thread:$0]  %s1, 512, %s132, [#allocation6], 128, 128, 8
        $region16: #{tpu_custom_call.1} parent=11 // pred_fallthru
          _
        // Predicated region
        $region17: #{tpu_custom_call.1} parent=11 // pred_check
          %p138 = pneg %p84
        $region18: #{tpu_custom_call.1} parent=11 // pred_check_branch
          %140 = sbr.rel (%p138) target = $region20
        $region19: #{tpu_custom_call.1} parent=11 // pred_region
          _
        $region20: #{tpu_custom_call.1} parent=11 // pred_fallthru
          _
      $region12: #{tpu_custom_call.1} parent=5 // pred_fallthru
        _
      %p141 = scmp.lt.s32.totalorder %s16, 2
      // Predicated region
      $region21: #{tpu_custom_call.1} parent=5 // pred_check
        %p142 = pneg %p141
      $region22: #{tpu_custom_call.1} parent=5 // pred_check_branch
        %144 = sbr.rel (%p142) target = $region24
      $region23: #{tpu_custom_call.1} parent=5 // pred_region
        // Predicated region
        $region25: #{tpu_custom_call.1} parent=23 // pred_check
          %p145 = pneg %p36
        $region26: #{tpu_custom_call.1} parent=23 // pred_check_branch
          %147 = sbr.rel (%p145) target = $region28
        $region27: #{tpu_custom_call.1} parent=23 // pred_region
          %s148 = sand.u32 %s26, 1
          %s149 = scalar_lea.sflag [#allocation3], %s148
          %s150 = sand.u32 %s26, 1
          %s151 = smul.addr %s150, 16
          %s152 = scalar_lea.vmem [#allocation2], %s151
          %s153 = smul.u32 2, %s16
          %s155 = ssub.s32 256, 256
          %156 = vsyncadd %s149, %s155
          %s157 = smul.addr %s153, 128
          %s158 = scalar_lea.hbm %s0, %s157
          %s159 = sshll.u32 %s152, 4
          %s160 = int_to_ptr.vmem [resolvable:$true] %s159
          %165 = dma.hbm_to_vmem [thread:$0]  %s158, 256, %s160, %s149, 128, 128, 8
        $region28: #{tpu_custom_call.1} parent=23 // pred_fallthru
          _
      $region24: #{tpu_custom_call.1} parent=5 // pred_fallthru
        _
      %p166 = scmp.le.s32.totalorder 1, %s16
      %p167 = scmp.lt.s32.totalorder %s16, 3
      %p168 = pnand %p166, %p167
      %p169 = pneg %p168
      // Predicated region
      $region29: #{tpu_custom_call.1} parent=5 // pred_check
        _
      $region30: #{tpu_custom_call.1} parent=5 // pred_check_branch
        %171 = sbr.rel (%p168) target = $region32
      $region31: #{tpu_custom_call.1} parent=5 // pred_region
        %s172 = ssub.s32 %s16, 1
        %s173 = sand.u32 %s29, 1
        %s174 = scalar_lea.sflag [#allocation3], %s173
        %s175 = sand.u32 %s29, 1
        %s176 = smul.addr %s175, 16
        %s177 = scalar_lea.vmem [#allocation2], %s176
        // Predicated region
        $region33: #{tpu_custom_call.1} parent=31 // pred_check
          %p178 = pneg %p42
        $region34: #{tpu_custom_call.1} parent=31 // pred_check_branch
          %180 = sbr.rel (%p178) target = $region36
        $region35: #{tpu_custom_call.1} parent=31 // pred_region
          %181 = dma.done %s174, 256
        $region36: #{tpu_custom_call.1} parent=31 // pred_fallthru
          _
        // Predicated region
        $region37: #{tpu_custom_call.1} parent=31 // pred_check
          %p182 = pneg %p63
        $region38: #{tpu_custom_call.1} parent=31 // pred_check_branch
          %184 = sbr.rel (%p182) target = $region40
        $region39: #{tpu_custom_call.1} parent=31 // pred_region
          %185 = dma.done [#allocation6], 512
        $region40: #{tpu_custom_call.1} parent=31 // pred_fallthru
          _
        %s186 = sand.u32 %s29, 1
        %s187 = scalar_lea.sflag [#allocation3], %s186
        %s188 = sand.u32 %s29, 1
        %s189 = smul.addr %s188, 16
        %s190 = scalar_lea.vmem [#allocation2], %s189
        %p191 = pneg %p42
        %p192 = pneg %p39
        %p193 = pneg %p63
        %p194 = pneg %p60
        %p195 = pneg %p84
        %p196 = pneg %p81
        %p197 = pneg %p110
        %p198 = pneg %p107
        %s199 = sand.u32 %s97, 1
        %s200 = scalar_lea.sflag [#allocation4], %s199
        %s201 = sand.u32 %s97, 1
        %s202 = smul.addr %s201, 16
        %s203 = scalar_lea.vmem [#allocation7], %s202
        %s204 = smul.u32 2, %s21
        %s205 = smul.u32 2, %s21
        %v206 = vld [vmem:[%s177] sm:$0xff]
        %v207 = vld [vmem:[%s177 + $0x8] sm:$0xff]
        %v208 = vld [vmem:[#allocation5] sm:$0xff]
        %v209 = vld [vmem:[#allocation5 + $0x8] sm:$0xff]
        %v210 = vld [vmem:[#allocation5 + $0x10] sm:$0xff]
        %v211 = vld [vmem:[#allocation5 + $0x18] sm:$0xff]
        %v212 = vld [vmem:[%s2] sm:$0x1]
        %v214 = vlaneseq
        %v215 = vshrl.u32 %v214, 7
        %v216 = vsub.s32 0, %v215
        %v217 = vrot.slane %v212, %v216
        %vm219 = vcmask 261120
        %v221 = vsel %vm219, %v206, 0
        %v224 = vsel %vm219, %v207, 0
        %226 = vmatprep.subr.mxu0 0.0
        %227 = vmatpush1.msra.mxu0 %v208
        %228 = vmatprep.subr.mxu0 0.0
        %229 = vmatpush1.msra.mxu0 %v209
        %230 = vmatprep.subr.mxu0 0.0
        %231 = vmatpush1.msra.mxu0 %v210
        %232 = vmatprep.subr.mxu0 0.0
        %233 = vmatpush1.msra.mxu0 %v211
        %234 = vmatprep.subr.mxu0 0.0
        %235 = vmatpush1.msra.mxu0 0.0
        %236 = vmatprep.subr.mxu0 0.0
        %237 = vmatpush1.msra.mxu0 0.0
        %238 = vmatprep.subr.mxu0 0.0
        %239 = vmatpush1.msra.mxu0 0.0
        %240 = vmatprep.subr.mxu0 0.0
        %241 = vmatpush1.msra.mxu0 0.0
        %242 = vmatprep.subr.mxu0 0.0
        %243 = vmatpush1.msra.mxu0 0.0
        %244 = vmatprep.subr.mxu0 0.0
        %245 = vmatpush1.msra.mxu0 0.0
        %246 = vmatprep.subr.mxu0 0.0
        %247 = vmatpush1.msra.mxu0 0.0
        %248 = vmatprep.subr.mxu0 0.0
        %249 = vmatpush1.msra.mxu0 0.0
        %250 = vmatprep.subr.mxu0 0.0
        %251 = vmatpush1.msra.mxu0 0.0
        %252 = vmatprep.subr.mxu0 0.0
        %253 = vmatpush1.msra.mxu0 0.0
        %254 = vmatprep.subr.mxu0 0.0
        %255 = vmatpush1.msra.mxu0 0.0
        %256 = vmatprep.subr.mxu0 0.0
        %257 = vmatpush1.msra.mxu0 0.0
        %258 = vmatprep.subr.mxu0 0.0
        %259 = vmatpush1.msra.mxu0 0.0
        %260 = vmatprep.subr.mxu0 0.0
        %261 = vmatpush1.msra.mxu0 0.0
        %262 = vmatprep.subr.mxu0 0.0
        %263 = vmatpush1.msra.mxu0 0.0
        %264 = vmatprep.subr.mxu0 0.0
        %265 = vmatpush1.msra.mxu0 0.0
        %266 = vmatprep.subr.mxu0 0.0
        %267 = vmatpush1.msra.mxu0 0.0
        %268 = vmatprep.subr.mxu0 0.0
        %269 = vmatpush1.msra.mxu0 0.0
        %270 = vmatprep.subr.mxu0 0.0
        %271 = vmatpush1.msra.mxu0 0.0
        %272 = vmatprep.subr.mxu0 0.0
        %273 = vmatpush1.msra.mxu0 0.0
        %274 = vmatprep.subr.mxu0 0.0
        %275 = vmatpush1.msra.mxu0 0.0
        %276 = vmatprep.subr.mxu0 0.0
        %277 = vmatpush1.msra.mxu0 0.0
        %278 = vmatprep.subr.mxu0 0.0
        %279 = vmatpush1.msra.mxu0 0.0
        %280 = vmatprep.subr.mxu0 0.0
        %281 = vmatpush1.msra.mxu0 0.0
        %282 = vmatprep.subr.mxu0 0.0
        %283 = vmatpush1.msra.mxu0 0.0
        %284 = vmatprep.subr.mxu0 0.0
        %285 = vmatpush1.msra.mxu0 0.0
        %286 = vmatprep.subr.mxu0 0.0
        %287 = vmatpush1.msra.mxu0 0.0
        %288 = vmatprep.subr.mxu0 0.0
        %289 = vmatpush1.msra.mxu0 0.0
        %290 = vmatprep.mubr.f32.mxu0 0.0
        %291 = vmatmul.mubr.f32.gmra.mrb[0].mxu0 %v221
        %v292 = vpop.f32.mrb[0].mxu0
        %v293 = vadd.f32 %v217, %v292
        %v294 = vpop.f32.mrb[0].mxu0
        %295 = vmatprep.mubr.f32.mxu0 0.0
        %296 = vmatmul.mubr.f32.gmra.mrb[0].mxu0 %v224
        %v297 = vpop.f32.mrb[0].mxu0
        %v298 = vadd.f32 %v217, %v297
        %v299 = vpop.f32.mrb[0].mxu0
        %300 = vdwg.mxu0
        %v301 = vtanh.pop %v293
        %v302 = vtanh.pop %v298
        %v303 = vadd.f32 %v301, 1.0
        %v304 = vadd.f32 %v302, 1.0
        %v305 = vmul.f32 %v303, 2.35
        %v306 = vmul.f32 %v304, 2.35
        %v307 = vadd.f32 %v305, -5.0
        %v308 = vadd.f32 %v306, -5.0
        %v309 = vmul.f32 %v307, 1.442695
        %v310 = vpow.pop %v309
        %v311 = vmul.f32 %v308, 1.442695
        %v312 = vpow.pop %v311
        %v313 = vlaneseq
        %v314 = vand.u32 %v313, 127
        %vm315 = vcmp.ge.s32.totalorder %v314, 64
        %v316 = vsel %vm315, %v310, %v293
        %v317 = vsel %vm315, %v312, %v298
        %318 = vst [vmem:[%s203] sm:$0xff] %v316
        %319 = vst [vmem:[%s203 + $0x8] sm:$0xff] %v317
        %s320 = sand.u32 %s97, 1
        %s321 = scalar_lea.sflag [#allocation4], %s320
        %s322 = sand.u32 %s97, 1
        %s323 = smul.addr %s322, 16
        %s324 = scalar_lea.vmem [#allocation7], %s323
        // Predicated region
        $region41: #{tpu_custom_call.1} parent=31 // pred_check
          %p325 = pneg %p107
        $region42: #{tpu_custom_call.1} parent=31 // pred_check_branch
          %327 = sbr.rel (%p325) target = $region44
        $region43: #{tpu_custom_call.1} parent=31 // pred_region
          %s328 = smul.u32 2, %s21
          %s330 = ssub.s32 256, 256
          %331 = vsyncadd %s321, %s330
          %s332 = smul.addr %s328, 128
          %s333 = scalar_lea.hbm %s3, %s332
          %s334 = sshll.u32 %s324, 4
          %s335 = int_to_ptr.vmem [resolvable:$true] %s334
          %340 = dma.vmem_to_hbm [thread:$0]  %s335, 256, %s333, %s321, 128, 128, 8
        $region44: #{tpu_custom_call.1} parent=31 // pred_fallthru
          _
      $region32: #{tpu_custom_call.1} parent=5 // pred_fallthru
        _
      %p341 = scmp.le.s32.totalorder 2, %s16
      // Predicated region
      $region45: #{tpu_custom_call.1} parent=5 // pred_check
        %p342 = pneg %p341
      $region46: #{tpu_custom_call.1} parent=5 // pred_check_branch
        %344 = sbr.rel (%p342) target = $region48
      $region47: #{tpu_custom_call.1} parent=5 // pred_region
        %s345 = ssub.s32 %s16, 2
        // Predicated region
        $region49: #{tpu_custom_call.1} parent=47 // pred_check
          %p346 = pneg %p113
        $region50: #{tpu_custom_call.1} parent=47 // pred_check_branch
          %348 = sbr.rel (%p346) target = $region52
        $region51: #{tpu_custom_call.1} parent=47 // pred_region
          %s349 = sand.u32 %s98, 1
          %s350 = scalar_lea.sflag [#allocation4], %s349
          %s351 = sand.u32 %s98, 1
          %s352 = smul.addr %s351, 16
          %s353 = scalar_lea.vmem [#allocation7], %s352
          %354 = dma.done %s350, 256
        $region52: #{tpu_custom_call.1} parent=47 // pred_fallthru
          _
      $region48: #{tpu_custom_call.1} parent=5 // pred_fallthru
        _
    $region6: #{tpu_custom_call.1} parent=1 // loop_footer
      %s20 = sadd.s32 1, %s16
    $region7: #{tpu_custom_call.1} parent=1 // loop_footer_branch
      %15 = sbr.rel target = $region3
    $region8: #{tpu_custom_call.1} parent=1 // loop_exit
      _
    %355 = vsyncpa [#allocation3], 1
    %s356 = scalar_lea.sflag [#allocation3], 1
    %357 = vsyncpa %s356, 1
    %358 = vsyncpa [#allocation6], 1
    %359 = vsyncpa [#allocation4], 1
    %s360 = scalar_lea.sflag [#allocation4], 1
    %361 = vsyncpa %s360, 1

</llo_original>
